<compile_context>
chip_gen: v7x
topology: tpu7x:2x2x1
jax: 0.10.0
libtpu: 0.0.40
codegen_flags: <defaults>
</compile_context>

<pallas_src>
import functools

import jax
import jax.numpy as jnp
from jax.experimental import pallas as pl
from jax.experimental.pallas import tpu as pltpu

EPSILON = float(jnp.finfo(jnp.float32).eps)  # matches torch.finfo(torch.float32).eps


def _round_up(x, m):
    return (x + m - 1) // m * m


def _unsupernet_kernel(h_ref, x_ref, w1t_ref, w2t_ref, o_ref, *, n_layers, l_1, l_2):
    """One batch tile; the full (unrolled) layer stack runs inside this body."""
    y = h_ref[...]          # (TB, Cp)   current factor, carried in registers/VMEM values
    x = x_ref[...]          # (TB, Fp)
    l1_eps = l_1 + EPSILON  # hoisted compile-time constant

    for i in range(n_layers):           # static unroll: weights indexed with static i
        w1t = w1t_ref[i]                # (Cp, Cp)  == fc1.weight.T (pre-transposed)
        w2t = w2t_ref[i]                # (Fp, Cp)  == fc2.weight.T (pre-transposed)
        denominator = (
            jnp.dot(y, w1t, preferred_element_type=jnp.float32)
            + l_2 * y + l1_eps
        )
        numerator = jnp.dot(x, w2t, preferred_element_type=jnp.float32)
        y = (numerator / denominator) * y

    o_ref[...] = y.astype(o_ref.dtype)  # single store per tile


def unsupernet_forward(h, x, w1_stack, w2_stack, l_1=0.0, l_2=0.0, batch_tile=None):
    """Full n_layers UnsuperNet forward pass in one Pallas call (batch-tiled grid)."""
    n_layers, comp, _ = w1_stack.shape
    batch, features = x.shape
    assert h.shape == (batch, comp)
    assert w2_stack.shape == (n_layers, comp, features)

    # Lane-dense padded sizes (multiples of 128 on the last dim, 8 on sublanes).
    comp_p = _round_up(comp, 128)
    feat_p = _round_up(features, 128)

    if batch_tile is None:
        batch_tile = min(_round_up(batch, 8), 256)
    batch_tile = _round_up(batch_tile, 8)
    batch_p = _round_up(batch, batch_tile)

    f32 = jnp.float32
    # Zero-pad inputs.  Padded h columns stay 0 through every layer because their
    # numerator is 0 and their denominator is l_1 + EPSILON > 0.
    h_p = jnp.zeros((batch_p, comp_p), f32).at[:batch, :comp].set(h.astype(f32))
    x_p = jnp.zeros((batch_p, feat_p), f32).at[:batch, :features].set(x.astype(f32))

    # Pre-transpose weight stacks once in the wrapper (nn.Linear: out = in @ W.T).
    w1t = jnp.zeros((n_layers, comp_p, comp_p), f32)
    w1t = w1t.at[:, :comp, :comp].set(jnp.transpose(w1_stack.astype(f32), (0, 2, 1)))
    w2t = jnp.zeros((n_layers, feat_p, comp_p), f32)
    w2t = w2t.at[:, :features, :comp].set(jnp.transpose(w2_stack.astype(f32), (0, 2, 1)))

    kernel = functools.partial(
        _unsupernet_kernel, n_layers=n_layers, l_1=float(l_1), l_2=float(l_2)
    )

    grid = (batch_p // batch_tile,)

    out_p = pl.pallas_call(
        kernel,
        out_shape=jax.ShapeDtypeStruct((batch_p, comp_p), f32),
        grid_spec=pltpu.PrefetchScalarGridSpec(
            num_scalar_prefetch=0,
            grid=grid,
            in_specs=[
                pl.BlockSpec((batch_tile, comp_p), lambda b: (b, 0)),        # h0 tile
                pl.BlockSpec((batch_tile, feat_p), lambda b: (b, 0)),        # x tile
                pl.BlockSpec((n_layers, comp_p, comp_p), lambda b: (0, 0, 0)),  # W1^T stack
                pl.BlockSpec((n_layers, feat_p, comp_p), lambda b: (0, 0, 0)),  # W2^T stack
            ],
            out_specs=pl.BlockSpec((batch_tile, comp_p), lambda b: (b, 0)),
        ),
        compiler_params=pltpu.CompilerParams(
            dimension_semantics=("parallel",),  # batch tiles are independent (megacore)
        ),
    )(h_p, x_p, w1t, w2t)

    return out_p[:batch, :comp]


def unsupernet_ref(h, x, w1_stack, w2_stack, l_1=0.0, l_2=0.0):
    """Pure-JAX reference mirroring the PyTorch forward exactly."""
    for i in range(w1_stack.shape[0]):
        denominator = h @ w1_stack[i].T + l_2 * h + l_1 + EPSILON
        numerator = x @ w2_stack[i].T
        h = (numerator / denominator) * h
    return h


if __name__ == "__main__":
    # Small, module-consistent shapes.
    n_layers = 4
    batch = 16
    comp = 8        # number of NMF components
    features = 32   # original feature length (e.g. mutational sites)
    l_1, l_2 = 0.1, 0.05

    key = jax.random.PRNGKey(0)
    k_h, k_x, k_w1, k_w2 = jax.random.split(key, 4)

    # NMF inputs are non-negative; weights initialized deterministically.
    h0 = jax.random.uniform(k_h, (batch, comp), dtype=jnp.float32)
    x = jax.random.uniform(k_x, (batch, features), dtype=jnp.float32)
    w1_stack = jax.random.uniform(k_w1, (n_layers, comp, comp), dtype=jnp.float32)
    w2_stack = jax.random.uniform(k_w2, (n_layers, comp, features), dtype=jnp.float32)

    # batch_tile=8 -> grid=(2,) exercises the batch-parallel axis.
    out = unsupernet_forward(h0, x, w1_stack, w2_stack, l_1=l_1, l_2=l_2, batch_tile=8)
    out = jax.block_until_ready(out)

    ref = unsupernet_ref(h0, x, w1_stack, w2_stack, l_1=l_1, l_2=l_2)
    assert out.shape == ref.shape
    assert jnp.allclose(out, ref, rtol=1e-4, atol=1e-5), "Pallas output mismatch vs reference"

    print("KERNEL_OK")
</pallas_src>

<mosaic_0001>
module attributes {stable_mosaic.version = 11 : i64} {
  func.func @_unsupernet_kernel(%arg0: i32, %arg1: memref<8x128xf32, #tpu.memory_space<vmem>>, %arg2: memref<8x128xf32, #tpu.memory_space<vmem>>, %arg3: memref<4x128x128xf32, #tpu.memory_space<vmem>>, %arg4: memref<4x128x128xf32, #tpu.memory_space<vmem>>, %arg5: memref<8x128xf32, #tpu.memory_space<vmem>>) attributes {dimension_semantics = [#tpu.dimension_semantics<parallel>], iteration_bounds = array<i64: 2>, scalar_prefetch = 0 : i64, scratch_operands = 0 : i64, tpu.core_type = #tpu.core_type<tc>, window_params = [{transform_indices = @transform_0, window_bounds = array<i64: 8, 128>}, {transform_indices = @transform_1, window_bounds = array<i64: 8, 128>}, {pipeline_mode = #tpu.pipeline_mode<synchronous>, transform_indices = @transform_2, window_bounds = array<i64: 4, 128, 128>}, {pipeline_mode = #tpu.pipeline_mode<synchronous>, transform_indices = @transform_3, window_bounds = array<i64: 4, 128, 128>}, {transform_indices = @transform_4, window_bounds = array<i64: 8, 128>}]} {
    %c0 = arith.constant 0 : index
    %c0_0 = arith.constant 0 : index
    %0 = vector.load %arg1[%c0, %c0_0] : memref<8x128xf32, #tpu.memory_space<vmem>>, vector<8x128xf32>
    %c0_1 = arith.constant 0 : index
    %c0_2 = arith.constant 0 : index
    %1 = vector.load %arg2[%c0_1, %c0_2] : memref<8x128xf32, #tpu.memory_space<vmem>>, vector<8x128xf32>
    %c0_3 = arith.constant 0 : index
    %c0_4 = arith.constant 0 : index
    %c0_5 = arith.constant 0 : index
    %2 = vector.load %arg3[%c0_3, %c0_4, %c0_5] : memref<4x128x128xf32, #tpu.memory_space<vmem>>, vector<1x128x128xf32>
    %3 = vector.shape_cast %2 : vector<1x128x128xf32> to vector<128x128xf32>
    %c0_6 = arith.constant 0 : index
    %c0_7 = arith.constant 0 : index
    %c0_8 = arith.constant 0 : index
    %4 = vector.load %arg4[%c0_6, %c0_7, %c0_8] : memref<4x128x128xf32, #tpu.memory_space<vmem>>, vector<1x128x128xf32>
    %5 = vector.shape_cast %4 : vector<1x128x128xf32> to vector<128x128xf32>
    %cst = arith.constant dense<0.000000e+00> : vector<8x128xf32>
    %6 = tpu.matmul %0, %3, %cst {dimension_numbers = #tpu.dot_dimension_numbers<[1], [0], [0], [1], [0, 0, 1, 1], [], []>} : vector<8x128xf32>, vector<128x128xf32>, vector<8x128xf32> -> vector<8x128xf32>
    %cst_9 = arith.constant 5.000000e-02 : f32
    %7 = vector.broadcast %cst_9 : f32 to vector<8x128xf32>
    %8 = arith.mulf %7, %0 : vector<8x128xf32>
    %9 = arith.addf %6, %8 : vector<8x128xf32>
    %cst_10 = arith.constant 0.100000121 : f32
    %10 = vector.broadcast %cst_10 : f32 to vector<8x128xf32>
    %11 = arith.addf %9, %10 : vector<8x128xf32>
    %cst_11 = arith.constant dense<0.000000e+00> : vector<8x128xf32>
    %12 = tpu.matmul %1, %5, %cst_11 {dimension_numbers = #tpu.dot_dimension_numbers<[1], [0], [0], [1], [0, 0, 1, 1], [], []>} : vector<8x128xf32>, vector<128x128xf32>, vector<8x128xf32> -> vector<8x128xf32>
    %13 = arith.divf %12, %11 : vector<8x128xf32>
    %14 = arith.mulf %13, %0 : vector<8x128xf32>
    %c1 = arith.constant 1 : index
    %c0_12 = arith.constant 0 : index
    %c0_13 = arith.constant 0 : index
    %15 = vector.load %arg3[%c1, %c0_12, %c0_13] : memref<4x128x128xf32, #tpu.memory_space<vmem>>, vector<1x128x128xf32>
    %16 = vector.shape_cast %15 : vector<1x128x128xf32> to vector<128x128xf32>
    %c1_14 = arith.constant 1 : index
    %c0_15 = arith.constant 0 : index
    %c0_16 = arith.constant 0 : index
    %17 = vector.load %arg4[%c1_14, %c0_15, %c0_16] : memref<4x128x128xf32, #tpu.memory_space<vmem>>, vector<1x128x128xf32>
    %18 = vector.shape_cast %17 : vector<1x128x128xf32> to vector<128x128xf32>
    %cst_17 = arith.constant dense<0.000000e+00> : vector<8x128xf32>
    %19 = tpu.matmul %14, %16, %cst_17 {dimension_numbers = #tpu.dot_dimension_numbers<[1], [0], [0], [1], [0, 0, 1, 1], [], []>} : vector<8x128xf32>, vector<128x128xf32>, vector<8x128xf32> -> vector<8x128xf32>
    %cst_18 = arith.constant 5.000000e-02 : f32
    %20 = vector.broadcast %cst_18 : f32 to vector<8x128xf32>
    %21 = arith.mulf %20, %14 : vector<8x128xf32>
    %22 = arith.addf %19, %21 : vector<8x128xf32>
    %cst_19 = arith.constant 0.100000121 : f32
    %23 = vector.broadcast %cst_19 : f32 to vector<8x128xf32>
    %24 = arith.addf %22, %23 : vector<8x128xf32>
    %cst_20 = arith.constant dense<0.000000e+00> : vector<8x128xf32>
    %25 = tpu.matmul %1, %18, %cst_20 {dimension_numbers = #tpu.dot_dimension_numbers<[1], [0], [0], [1], [0, 0, 1, 1], [], []>} : vector<8x128xf32>, vector<128x128xf32>, vector<8x128xf32> -> vector<8x128xf32>
    %26 = arith.divf %25, %24 : vector<8x128xf32>
    %27 = arith.mulf %26, %14 : vector<8x128xf32>
    %c2 = arith.constant 2 : index
    %c0_21 = arith.constant 0 : index
    %c0_22 = arith.constant 0 : index
    %28 = vector.load %arg3[%c2, %c0_21, %c0_22] : memref<4x128x128xf32, #tpu.memory_space<vmem>>, vector<1x128x128xf32>
    %29 = vector.shape_cast %28 : vector<1x128x128xf32> to vector<128x128xf32>
    %c2_23 = arith.constant 2 : index
    %c0_24 = arith.constant 0 : index
    %c0_25 = arith.constant 0 : index
    %30 = vector.load %arg4[%c2_23, %c0_24, %c0_25] : memref<4x128x128xf32, #tpu.memory_space<vmem>>, vector<1x128x128xf32>
    %31 = vector.shape_cast %30 : vector<1x128x128xf32> to vector<128x128xf32>
    %cst_26 = arith.constant dense<0.000000e+00> : vector<8x128xf32>
    %32 = tpu.matmul %27, %29, %cst_26 {dimension_numbers = #tpu.dot_dimension_numbers<[1], [0], [0], [1], [0, 0, 1, 1], [], []>} : vector<8x128xf32>, vector<128x128xf32>, vector<8x128xf32> -> vector<8x128xf32>
    %cst_27 = arith.constant 5.000000e-02 : f32
    %33 = vector.broadcast %cst_27 : f32 to vector<8x128xf32>
    %34 = arith.mulf %33, %27 : vector<8x128xf32>
    %35 = arith.addf %32, %34 : vector<8x128xf32>
    %cst_28 = arith.constant 0.100000121 : f32
    %36 = vector.broadcast %cst_28 : f32 to vector<8x128xf32>
    %37 = arith.addf %35, %36 : vector<8x128xf32>
    %cst_29 = arith.constant dense<0.000000e+00> : vector<8x128xf32>
    %38 = tpu.matmul %1, %31, %cst_29 {dimension_numbers = #tpu.dot_dimension_numbers<[1], [0], [0], [1], [0, 0, 1, 1], [], []>} : vector<8x128xf32>, vector<128x128xf32>, vector<8x128xf32> -> vector<8x128xf32>
    %39 = arith.divf %38, %37 : vector<8x128xf32>
    %40 = arith.mulf %39, %27 : vector<8x128xf32>
    %c3 = arith.constant 3 : index
    %c0_30 = arith.constant 0 : index
    %c0_31 = arith.constant 0 : index
    %41 = vector.load %arg3[%c3, %c0_30, %c0_31] : memref<4x128x128xf32, #tpu.memory_space<vmem>>, vector<1x128x128xf32>
    %42 = vector.shape_cast %41 : vector<1x128x128xf32> to vector<128x128xf32>
    %c3_32 = arith.constant 3 : index
    %c0_33 = arith.constant 0 : index
    %c0_34 = arith.constant 0 : index
    %43 = vector.load %arg4[%c3_32, %c0_33, %c0_34] : memref<4x128x128xf32, #tpu.memory_space<vmem>>, vector<1x128x128xf32>
    %44 = vector.shape_cast %43 : vector<1x128x128xf32> to vector<128x128xf32>
    %cst_35 = arith.constant dense<0.000000e+00> : vector<8x128xf32>
    %45 = tpu.matmul %40, %42, %cst_35 {dimension_numbers = #tpu.dot_dimension_numbers<[1], [0], [0], [1], [0, 0, 1, 1], [], []>} : vector<8x128xf32>, vector<128x128xf32>, vector<8x128xf32> -> vector<8x128xf32>
    %cst_36 = arith.constant 5.000000e-02 : f32
    %46 = vector.broadcast %cst_36 : f32 to vector<8x128xf32>
    %47 = arith.mulf %46, %40 : vector<8x128xf32>
    %48 = arith.addf %45, %47 : vector<8x128xf32>
    %cst_37 = arith.constant 0.100000121 : f32
    %49 = vector.broadcast %cst_37 : f32 to vector<8x128xf32>
    %50 = arith.addf %48, %49 : vector<8x128xf32>
    %cst_38 = arith.constant dense<0.000000e+00> : vector<8x128xf32>
    %51 = tpu.matmul %1, %44, %cst_38 {dimension_numbers = #tpu.dot_dimension_numbers<[1], [0], [0], [1], [0, 0, 1, 1], [], []>} : vector<8x128xf32>, vector<128x128xf32>, vector<8x128xf32> -> vector<8x128xf32>
    %52 = arith.divf %51, %50 : vector<8x128xf32>
    %53 = arith.mulf %52, %40 : vector<8x128xf32>
    %c0_39 = arith.constant 0 : index
    %c0_40 = arith.constant 0 : index
    %54 = vector.load %arg5[%c0_39, %c0_40] : memref<8x128xf32, #tpu.memory_space<vmem>>, vector<8x128xf32>
    tpu.vector_store %arg5[%c0_39, %c0_40], %53 {strides = array<i32>} : memref<8x128xf32, #tpu.memory_space<vmem>>, vector<8x128xf32>,
    return
  }
  func.func @transform_0(%arg0: i32) -> (i32, i32) {
    %c0_i32 = arith.constant 0 : i32
    %c0_i32_0 = arith.constant 0 : i32
    return %arg0, %c0_i32 : i32, i32
  }
  func.func @transform_1(%arg0: i32) -> (i32, i32) {
    %c0_i32 = arith.constant 0 : i32
    %c0_i32_0 = arith.constant 0 : i32
    return %arg0, %c0_i32 : i32, i32
  }
  func.func @transform_2(%arg0: i32) -> (i32, i32, i32) {
    %c0_i32 = arith.constant 0 : i32
    %c0_i32_0 = arith.constant 0 : i32
    %c0_i32_1 = arith.constant 0 : i32
    %c0_i32_2 = arith.constant 0 : i32
    return %c0_i32, %c0_i32_0, %c0_i32_1 : i32, i32, i32
  }
  func.func @transform_3(%arg0: i32) -> (i32, i32, i32) {
    %c0_i32 = arith.constant 0 : i32
    %c0_i32_0 = arith.constant 0 : i32
    %c0_i32_1 = arith.constant 0 : i32
    %c0_i32_2 = arith.constant 0 : i32
    return %c0_i32, %c0_i32_0, %c0_i32_1 : i32, i32, i32
  }
  func.func @transform_4(%arg0: i32) -> (i32, i32) {
    %c0_i32 = arith.constant 0 : i32
    %c0_i32_0 = arith.constant 0 : i32
    return %arg0, %c0_i32 : i32, i32
  }
}

</mosaic_0001>

<llo_original>
// kernel: tpu_custom_call.1
$region0: #{tpu_custom_call.1}
  #allocation0 [shape = 'u32[]', space=smem, size = 0x4, offset = 0x4, fixed_abs, tag = 'smem constant byte address 0x4 - core index']
  #allocation1 [shape = 'u32[144,128]{1,0:T(1,128)}', space=vmem, size = 0x12000, scoped, tag = 'internal scratch']
  %s0 = inlined_call_operand.hbm [shape: f32[16,128], index: 0, kind: input, shape index: {}]
  %s1 = inlined_call_operand.hbm [shape: f32[16,128], index: 1, kind: input, shape index: {}]
  %s2 = inlined_call_operand.hbm [shape: f32[4,128,128], index: 2, kind: input, shape index: {}]
  %s3 = inlined_call_operand.hbm [shape: f32[4,128,128], index: 3, kind: input, shape index: {}]
  %s4 = inlined_call_operand.hbm [shape: f32[16,128], index: 4, kind: output, shape index: {}]
  %s5 = sld [smem:[#allocation0]]
  $region65: #{tpu_custom_call.1} parent=0
    _
  %s7 = ssub.s32 1, %s5
  %s8 = scalar_select 0, %s7, %s5
  $region1: #{tpu_custom_call.1} parent=0
    #allocation2 [shape = 'u8[8192]{0}', space=vmem, size = 0x2000, scoped, tag = 'input window, operand 0']
    #allocation3 [shape = 's32[2]{0}', space=sflag, size = 0x8, scoped, tag = 'scoped memory for tpu_custom_call.1']
    #allocation4 [shape = 's32[2]{0}', space=sflag, size = 0x8, scoped, tag = 'scoped memory for tpu_custom_call.1']
    #allocation5 [shape = 'u8[8192]{0}', space=vmem, size = 0x2000, scoped, tag = 'input window, operand 1']
    #allocation6 [shape = 's32[2]{0}', space=sflag, size = 0x8, scoped, tag = 'scoped memory for tpu_custom_call.1']
    #allocation7 [shape = 'u8[262144]{0}', space=vmem, size = 0x40000, scoped, tag = 'input window, operand 2, single buffered']
    #allocation8 [shape = 'u8[262144]{0}', space=vmem, size = 0x40000, scoped, tag = 'input window, operand 3, single buffered']
    #allocation9 [shape = 's32[1]{0}', space=sflag, size = 0x4, scoped, tag = 'scoped memory for tpu_custom_call.1']
    #allocation10 [shape = 'u8[8192]{0}', space=vmem, size = 0x2000, scoped, tag = 'output window, operand 0']
    %9 = vsyncpa [#allocation3], 0
    %s10 = scalar_lea.sflag [#allocation3], 1
    %11 = vsyncpa %s10, 0
    %12 = vsyncpa [#allocation6], 0
    %s13 = scalar_lea.sflag [#allocation6], 1
    %14 = vsyncpa %s13, 0
    %15 = vsyncpa [#allocation9], 0
    %16 = vsyncpa [#allocation4], 0
    %s17 = scalar_lea.sflag [#allocation4], 1
    %18 = vsyncpa %s17, 0
    loop: start=0, step=1, limit=4
    $region2: #{tpu_custom_call.1} parent=1 // loop_pre_header
      _
    $region3: #{tpu_custom_call.1} parent=1 // loop_header
      %s20 = sphi 0, %s24
      %p21 = scmp.ge.s32.totalorder %s20, 4
      %s30 = sphi 0, %s32
      %s33 = sphi 0, %s30
      %s34 = sphi 0, %s33
      %s50 = sphi 0, %s34
      %s56 = sphi 0, %s58
      %s59 = sphi 0, %s56
      %s60 = sphi 0, %s59
      %s76 = sphi 0, %s60
      %s80 = sphi 0, %s80
      %s82 = sphi 0, %s80
      %s83 = sphi 0, %s82
      %s97 = sphi 0, %s83
      %s101 = sphi 0, %s101
      %s103 = sphi 0, %s101
      %s104 = sphi 0, %s103
      %s118 = sphi 0, %s104
      %s124 = sphi 0, %s126
      %s127 = sphi 0, %s124
      %s128 = sphi 0, %s127
      %s144 = sphi 0, %s128
    $region4: #{tpu_custom_call.1} parent=1 // loop_header_branch
      %23 = sbr.rel (%p21) target = $region8
    $region5: #{tpu_custom_call.1} parent=1 // loop_body
      %s25 = ssub.s32 %s20, 1
      %s26 = ssub.s32 %s20, 2
      %s27 = sadd.s32 %s20, 1
      %s28 = ssub.s32 %s20, %s27
      %p29 = scmp.eq.s32.totalorder %s28, 0
      %s31 = sadd.s32 %s30, 1
      %s32 = scalar_select %p29, %s30, %s31
      %p35 = pneg %p29
      %p36 = scmp.eq.s32.totalorder %s20, 1
      %p37 = por %p35, %p36
      %p38 = scmp.ne.s32.totalorder %s30, %s33
      %p39 = scmp.eq.s32.totalorder %s20, 0
      %p40 = por %p38, %p39
      %p41 = scmp.ne.s32.totalorder %s30, %s33
      %p42 = scmp.eq.s32.totalorder %s25, 1
      %p43 = por %p41, %p42
      %p44 = scmp.ne.s32.totalorder %s33, %s34
      %p45 = scmp.eq.s32.totalorder %s25, 0
      %p46 = por %p44, %p45
      %p47 = scmp.ne.s32.totalorder %s33, %s34
      %p48 = scmp.eq.s32.totalorder %s26, 1
      %p49 = por %p47, %p48
      %p51 = scmp.ne.s32.totalorder %s34, %s50
      %p52 = scmp.eq.s32.totalorder %s26, 0
      %p53 = por %p51, %p52
      %s54 = ssub.s32 %s20, %s27
      %p55 = scmp.eq.s32.totalorder %s54, 0
      %s57 = sadd.s32 %s56, 1
      %s58 = scalar_select %p55, %s56, %s57
      %p61 = pneg %p55
      %p62 = scmp.eq.s32.totalorder %s20, 1
      %p63 = por %p61, %p62
      %p64 = scmp.ne.s32.totalorder %s56, %s59
      %p65 = scmp.eq.s32.totalorder %s20, 0
      %p66 = por %p64, %p65
      %p67 = scmp.ne.s32.totalorder %s56, %s59
      %p68 = scmp.eq.s32.totalorder %s25, 1
      %p69 = por %p67, %p68
      %p70 = scmp.ne.s32.totalorder %s59, %s60
      %p71 = scmp.eq.s32.totalorder %s25, 0
      %p72 = por %p70, %p71
      %p73 = scmp.ne.s32.totalorder %s59, %s60
      %p74 = scmp.eq.s32.totalorder %s26, 1
      %p75 = por %p73, %p74
      %p77 = scmp.ne.s32.totalorder %s60, %s76
      %p78 = scmp.eq.s32.totalorder %s26, 0
      %p79 = por %p77, %p78
      %s81 = sadd.s32 %s80, 1
      %p84 = scmp.eq.s32.totalorder %s20, 1
      %p85 = scmp.ne.s32.totalorder %s80, %s82
      %p86 = scmp.eq.s32.totalorder %s20, 0
      %p87 = por %p85, %p86
      %p88 = scmp.ne.s32.totalorder %s80, %s82
      %p89 = scmp.eq.s32.totalorder %s25, 1
      %p90 = por %p88, %p89
      %p91 = scmp.ne.s32.totalorder %s82, %s83
      %p92 = scmp.eq.s32.totalorder %s25, 0
      %p93 = por %p91, %p92
      %p94 = scmp.ne.s32.totalorder %s82, %s83
      %p95 = scmp.eq.s32.totalorder %s26, 1
      %p96 = por %p94, %p95
      %p98 = scmp.ne.s32.totalorder %s83, %s97
      %p99 = scmp.eq.s32.totalorder %s26, 0
      %p100 = por %p98, %p99
      %s102 = sadd.s32 %s101, 1
      %p105 = scmp.eq.s32.totalorder %s20, 1
      %p106 = scmp.ne.s32.totalorder %s101, %s103
      %p107 = scmp.eq.s32.totalorder %s20, 0
      %p108 = por %p106, %p107
      %p109 = scmp.ne.s32.totalorder %s101, %s103
      %p110 = scmp.eq.s32.totalorder %s25, 1
      %p111 = por %p109, %p110
      %p112 = scmp.ne.s32.totalorder %s103, %s104
      %p113 = scmp.eq.s32.totalorder %s25, 0
      %p114 = por %p112, %p113
      %p115 = scmp.ne.s32.totalorder %s103, %s104
      %p116 = scmp.eq.s32.totalorder %s26, 1
      %p117 = por %p115, %p116
      %p119 = scmp.ne.s32.totalorder %s104, %s118
      %p120 = scmp.eq.s32.totalorder %s26, 0
      %p121 = por %p119, %p120
      %s122 = ssub.s32 %s20, %s27
      %p123 = scmp.eq.s32.totalorder %s122, 0
      %s125 = sadd.s32 %s124, 1
      %s126 = scalar_select %p123, %s124, %s125
      %p129 = pneg %p123
      %p130 = scmp.eq.s32.totalorder %s20, 1
      %p131 = por %p129, %p130
      %p132 = scmp.ne.s32.totalorder %s124, %s127
      %p133 = scmp.eq.s32.totalorder %s20, 0
      %p134 = por %p132, %p133
      %p135 = scmp.ne.s32.totalorder %s124, %s127
      %p136 = scmp.eq.s32.totalorder %s25, 1
      %p137 = por %p135, %p136
      %p138 = scmp.ne.s32.totalorder %s127, %s128
      %p139 = scmp.eq.s32.totalorder %s25, 0
      %p140 = por %p138, %p139
      %p141 = scmp.ne.s32.totalorder %s127, %s128
      %p142 = scmp.eq.s32.totalorder %s26, 1
      %p143 = por %p141, %p142
      %p145 = scmp.ne.s32.totalorder %s128, %s144
      %p146 = scmp.eq.s32.totalorder %s26, 0
      %p147 = por %p145, %p146
      %p148 = scmp.le.s32.totalorder 1, %s20
      %p149 = scmp.lt.s32.totalorder %s20, 3
      %p150 = pnand %p148, %p149
      %p151 = pneg %p150
      // Predicated region
      $region9: #{tpu_custom_call.1} parent=5 // pred_check
        _
      $region10: #{tpu_custom_call.1} parent=5 // pred_check_branch
        %153 = sbr.rel (%p150) target = $region12
      $region11: #{tpu_custom_call.1} parent=5 // pred_region
        %s154 = ssub.s32 %s20, 1
        // Predicated region
        $region13: #{tpu_custom_call.1} parent=11 // pred_check
          %p155 = pneg %p93
        $region14: #{tpu_custom_call.1} parent=11 // pred_check_branch
          %157 = sbr.rel (%p155) target = $region16
        $region15: #{tpu_custom_call.1} parent=11 // pred_region
          %s159 = ssub.s32 8192, 8192
          %160 = vsyncadd [#allocation6], %s159
          %s161 = sshll.u32 [#allocation7], 4
          %s162 = int_to_ptr.vmem [resolvable:$true] %s161
          %167 = dma.hbm_to_vmem [thread:$0]  %s2, 8192, %s162, [#allocation6], 128, 128, 8
        $region16: #{tpu_custom_call.1} parent=11 // pred_fallthru
          _
        // Predicated region
        $region17: #{tpu_custom_call.1} parent=11 // pred_check
          %p168 = pneg %p114
        $region18: #{tpu_custom_call.1} parent=11 // pred_check_branch
          %170 = sbr.rel (%p168) target = $region20
        $region19: #{tpu_custom_call.1} parent=11 // pred_region
          %s172 = ssub.s32 8192, 8192
          %173 = vsyncadd [#allocation9], %s172
          %s174 = sshll.u32 [#allocation8], 4
          %s175 = int_to_ptr.vmem [resolvable:$true] %s174
          %180 = dma.hbm_to_vmem [thread:$0]  %s3, 8192, %s175, [#allocation9], 128, 128, 8
        $region20: #{tpu_custom_call.1} parent=11 // pred_fallthru
          _
      $region12: #{tpu_custom_call.1} parent=5 // pred_fallthru
        _
      %p181 = scmp.lt.s32.totalorder %s20, 2
      // Predicated region
      $region21: #{tpu_custom_call.1} parent=5 // pred_check
        %p182 = pneg %p181
      $region22: #{tpu_custom_call.1} parent=5 // pred_check_branch
        %184 = sbr.rel (%p182) target = $region24
      $region23: #{tpu_custom_call.1} parent=5 // pred_region
        // Predicated region
        $region25: #{tpu_custom_call.1} parent=23 // pred_check
          %p185 = pneg %p40
        $region26: #{tpu_custom_call.1} parent=23 // pred_check_branch
          %187 = sbr.rel (%p185) target = $region28
        $region27: #{tpu_custom_call.1} parent=23 // pred_region
          %s188 = sand.u32 %s30, 1
          %s189 = scalar_lea.sflag [#allocation3], %s188
          %s190 = sand.u32 %s30, 1
          %s191 = smul.addr %s190, 8
          %s192 = scalar_lea.vmem [#allocation2], %s191
          %s194 = ssub.s32 128, 128
          %195 = vsyncadd %s189, %s194
          %s196 = smul.addr %s20, 128
          %s197 = scalar_lea.hbm %s0, %s196
          %s199 = sshll.u32 %s192, 4
          %s200 = int_to_ptr.vmem [resolvable:$true] %s199
          %202 = dma.hbm_to_vmem [thread:$0]  %s197, 128, %s200, %s189
        $region28: #{tpu_custom_call.1} parent=23 // pred_fallthru
          _
        // Predicated region
        $region29: #{tpu_custom_call.1} parent=23 // pred_check
          %p203 = pneg %p66
        $region30: #{tpu_custom_call.1} parent=23 // pred_check_branch
          %205 = sbr.rel (%p203) target = $region32
        $region31: #{tpu_custom_call.1} parent=23 // pred_region
          %s206 = sand.u32 %s20, 1
          %s207 = scalar_lea.sflag [#allocation6], %s206
          %s208 = sand.u32 %s56, 1
          %s209 = smul.addr %s208, 8
          %s210 = scalar_lea.vmem [#allocation5], %s209
          %s212 = ssub.s32 128, 128
          %213 = vsyncadd %s207, %s212
          %s214 = smul.addr %s20, 128
          %s215 = scalar_lea.hbm %s1, %s214
          %s217 = sshll.u32 %s210, 4
          %s218 = int_to_ptr.vmem [resolvable:$true] %s217
          %220 = dma.hbm_to_vmem [thread:$0]  %s215, 128, %s218, %s207
        $region32: #{tpu_custom_call.1} parent=23 // pred_fallthru
          _
      $region24: #{tpu_custom_call.1} parent=5 // pred_fallthru
        _
      %p221 = scmp.le.s32.totalorder 1, %s20
      %p222 = scmp.lt.s32.totalorder %s20, 3
      %p223 = pnand %p221, %p222
      %p224 = pneg %p223
      // Predicated region
      $region33: #{tpu_custom_call.1} parent=5 // pred_check
        _
      $region34: #{tpu_custom_call.1} parent=5 // pred_check_branch
        %226 = sbr.rel (%p223) target = $region36
      $region35: #{tpu_custom_call.1} parent=5 // pred_region
        %s227 = ssub.s32 %s20, 1
        %s228 = sand.u32 %s33, 1
        %s229 = scalar_lea.sflag [#allocation3], %s228
        %s230 = sand.u32 %s33, 1
        %s231 = smul.addr %s230, 8
        %s232 = scalar_lea.vmem [#allocation2], %s231
        // Predicated region
        $region37: #{tpu_custom_call.1} parent=35 // pred_check
          %p233 = pneg %p46
        $region38: #{tpu_custom_call.1} parent=35 // pred_check_branch
          %235 = sbr.rel (%p233) target = $region40
        $region39: #{tpu_custom_call.1} parent=35 // pred_region
          %236 = dma.done %s229, 128
        $region40: #{tpu_custom_call.1} parent=35 // pred_fallthru
          _
        %s237 = sand.u32 %s25, 1
        %s238 = scalar_lea.sflag [#allocation6], %s237
        %s239 = sand.u32 %s59, 1
        %s240 = smul.addr %s239, 8
        %s241 = scalar_lea.vmem [#allocation5], %s240
        // Predicated region
        $region41: #{tpu_custom_call.1} parent=35 // pred_check
          %p242 = pneg %p72
        $region42: #{tpu_custom_call.1} parent=35 // pred_check_branch
          %244 = sbr.rel (%p242) target = $region44
        $region43: #{tpu_custom_call.1} parent=35 // pred_region
          %245 = dma.done %s238, 128
        $region44: #{tpu_custom_call.1} parent=35 // pred_fallthru
          _
        // Predicated region
        $region45: #{tpu_custom_call.1} parent=35 // pred_check
          %p246 = pneg %p93
        $region46: #{tpu_custom_call.1} parent=35 // pred_check_branch
          %248 = sbr.rel (%p246) target = $region48
        $region47: #{tpu_custom_call.1} parent=35 // pred_region
          %249 = dma.done [#allocation6], 8192
        $region48: #{tpu_custom_call.1} parent=35 // pred_fallthru
          _
        // Predicated region
        $region49: #{tpu_custom_call.1} parent=35 // pred_check
          %p250 = pneg %p114
        $region50: #{tpu_custom_call.1} parent=35 // pred_check_branch
          %252 = sbr.rel (%p250) target = $region52
        $region51: #{tpu_custom_call.1} parent=35 // pred_region
          %253 = dma.done [#allocation9], 8192
        $region52: #{tpu_custom_call.1} parent=35 // pred_fallthru
          _
        %s254 = sand.u32 %s33, 1
        %s255 = scalar_lea.sflag [#allocation3], %s254
        %s256 = sand.u32 %s33, 1
        %s257 = smul.addr %s256, 8
        %s258 = scalar_lea.vmem [#allocation2], %s257
        %p259 = pneg %p46
        %p260 = pneg %p43
        %s261 = sand.u32 %s25, 1
        %s262 = scalar_lea.sflag [#allocation6], %s261
        %s263 = sand.u32 %s59, 1
        %s264 = smul.addr %s263, 8
        %s265 = scalar_lea.vmem [#allocation5], %s264
        %p266 = pneg %p72
        %p267 = pneg %p69
        %p268 = pneg %p93
        %p269 = pneg %p90
        %p270 = pneg %p114
        %p271 = pneg %p111
        %p272 = pneg %p140
        %p273 = pneg %p137
        %s274 = sand.u32 %s127, 1
        %s275 = scalar_lea.sflag [#allocation4], %s274
        %s276 = sand.u32 %s127, 1
        %s277 = smul.addr %s276, 8
        %s278 = scalar_lea.vmem [#allocation10], %s277
        %v279 = vld [vmem:[%s232] sm:$0xff]
        %v280 = vld [vmem:[%s241] sm:$0xff]
        %v281 = vld [vmem:[#allocation7] sm:$0xff]
        %v282 = vld [vmem:[#allocation7 + $0x8] sm:$0xff]
        %v283 = vld [vmem:[#allocation7 + $0x10] sm:$0xff]
        %v284 = vld [vmem:[#allocation7 + $0x18] sm:$0xff]
        %v285 = vld [vmem:[#allocation7 + $0x20] sm:$0xff]
        %v286 = vld [vmem:[#allocation7 + $0x28] sm:$0xff]
        %v287 = vld [vmem:[#allocation7 + $0x30] sm:$0xff]
        %v288 = vld [vmem:[#allocation7 + $0x38] sm:$0xff]
        %v289 = vld [vmem:[#allocation7 + $0x40] sm:$0xff]
        %v290 = vld [vmem:[#allocation7 + $0x48] sm:$0xff]
        %v291 = vld [vmem:[#allocation7 + $0x50] sm:$0xff]
        %v292 = vld [vmem:[#allocation7 + $0x58] sm:$0xff]
        %v293 = vld [vmem:[#allocation7 + $0x60] sm:$0xff]
        %v294 = vld [vmem:[#allocation7 + $0x68] sm:$0xff]
        %v295 = vld [vmem:[#allocation7 + $0x70] sm:$0xff]
        %v296 = vld [vmem:[#allocation7 + $0x78] sm:$0xff]
        %v297 = vld [vmem:[#allocation8] sm:$0xff]
        %v298 = vld [vmem:[#allocation8 + $0x8] sm:$0xff]
        %v299 = vld [vmem:[#allocation8 + $0x10] sm:$0xff]
        %v300 = vld [vmem:[#allocation8 + $0x18] sm:$0xff]
        %v301 = vld [vmem:[#allocation8 + $0x20] sm:$0xff]
        %v302 = vld [vmem:[#allocation8 + $0x28] sm:$0xff]
        %v303 = vld [vmem:[#allocation8 + $0x30] sm:$0xff]
        %v304 = vld [vmem:[#allocation8 + $0x38] sm:$0xff]
        %v305 = vld [vmem:[#allocation8 + $0x40] sm:$0xff]
        %v306 = vld [vmem:[#allocation8 + $0x48] sm:$0xff]
        %v307 = vld [vmem:[#allocation8 + $0x50] sm:$0xff]
        %v308 = vld [vmem:[#allocation8 + $0x58] sm:$0xff]
        %v309 = vld [vmem:[#allocation8 + $0x60] sm:$0xff]
        %v310 = vld [vmem:[#allocation8 + $0x68] sm:$0xff]
        %v311 = vld [vmem:[#allocation8 + $0x70] sm:$0xff]
        %v312 = vld [vmem:[#allocation8 + $0x78] sm:$0xff]
        %v313 = vmul.f32 %v279, 0.05
        %314 = vmatprep.subr.mxu0 0.0
        %315 = vmatpush1.msra.mxu0 %v281
        %316 = vmatprep.subr.mxu0 0.0
        %317 = vmatpush1.msra.mxu0 %v282
        %318 = vmatprep.subr.mxu0 0.0
        %319 = vmatpush1.msra.mxu0 %v283
        %320 = vmatprep.subr.mxu0 0.0
        %321 = vmatpush1.msra.mxu0 %v284
        %322 = vmatprep.subr.mxu0 0.0
        %323 = vmatpush1.msra.mxu0 %v285
        %324 = vmatprep.subr.mxu0 0.0
        %325 = vmatpush1.msra.mxu0 %v286
        %326 = vmatprep.subr.mxu0 0.0
        %327 = vmatpush1.msra.mxu0 %v287
        %328 = vmatprep.subr.mxu0 0.0
        %329 = vmatpush1.msra.mxu0 %v288
        %330 = vmatprep.subr.mxu0 0.0
        %331 = vmatpush1.msra.mxu0 %v289
        %332 = vmatprep.subr.mxu0 0.0
        %333 = vmatpush1.msra.mxu0 %v290
        %334 = vmatprep.subr.mxu0 0.0
        %335 = vmatpush1.msra.mxu0 %v291
        %336 = vmatprep.subr.mxu0 0.0
        %337 = vmatpush1.msra.mxu0 %v292
        %338 = vmatprep.subr.mxu0 0.0
        %339 = vmatpush1.msra.mxu0 %v293
        %340 = vmatprep.subr.mxu0 0.0
        %341 = vmatpush1.msra.mxu0 %v294
        %342 = vmatprep.subr.mxu0 0.0
        %343 = vmatpush1.msra.mxu0 %v295
        %344 = vmatprep.subr.mxu0 0.0
        %345 = vmatpush1.msra.mxu0 %v296
        %346 = vmatprep.subr.mxu0 0.0
        %347 = vmatpush1.msra.mxu0 0.0
        %348 = vmatprep.subr.mxu0 0.0
        %349 = vmatpush1.msra.mxu0 0.0
        %350 = vmatprep.subr.mxu0 0.0
        %351 = vmatpush1.msra.mxu0 0.0
        %352 = vmatprep.subr.mxu0 0.0
        %353 = vmatpush1.msra.mxu0 0.0
        %354 = vmatprep.subr.mxu0 0.0
        %355 = vmatpush1.msra.mxu0 0.0
        %356 = vmatprep.subr.mxu0 0.0
        %357 = vmatpush1.msra.mxu0 0.0
        %358 = vmatprep.subr.mxu0 0.0
        %359 = vmatpush1.msra.mxu0 0.0
        %360 = vmatprep.subr.mxu0 0.0
        %361 = vmatpush1.msra.mxu0 0.0
        %362 = vmatprep.subr.mxu0 0.0
        %363 = vmatpush1.msra.mxu0 0.0
        %364 = vmatprep.subr.mxu0 0.0
        %365 = vmatpush1.msra.mxu0 0.0
        %366 = vmatprep.subr.mxu0 0.0
        %367 = vmatpush1.msra.mxu0 0.0
        %368 = vmatprep.subr.mxu0 0.0
        %369 = vmatpush1.msra.mxu0 0.0
        %370 = vmatprep.subr.mxu0 0.0
        %371 = vmatpush1.msra.mxu0 0.0
        %372 = vmatprep.subr.mxu0 0.0
        %373 = vmatpush1.msra.mxu0 0.0
        %374 = vmatprep.subr.mxu0 0.0
        %375 = vmatpush1.msra.mxu0 0.0
        %376 = vmatprep.subr.mxu0 0.0
        %377 = vmatpush1.msra.mxu0 0.0
        %378 = vmatprep.mubr.f32.mxu0 0.0
        %379 = vmatmul.mubr.f32.gmra.mrb[0].mxu0 %v279
        %v380 = vpop.f32.mrb[0].mxu0
        %v381 = vadd.f32 %v313, %v380
        %v382 = vpop.f32.mrb[0].mxu0
        %383 = vdwg.mxu0
        %v384 = vadd.f32 %v381, 0.10000012
        %385 = vmatprep.subr.mxu0 0.0
        %386 = vmatpush1.msra.mxu0 %v297
        %387 = vmatprep.subr.mxu0 0.0
        %388 = vmatpush1.msra.mxu0 %v298
        %389 = vmatprep.subr.mxu0 0.0
        %390 = vmatpush1.msra.mxu0 %v299
        %391 = vmatprep.subr.mxu0 0.0
        %392 = vmatpush1.msra.mxu0 %v300
        %393 = vmatprep.subr.mxu0 0.0
        %394 = vmatpush1.msra.mxu0 %v301
        %395 = vmatprep.subr.mxu0 0.0
        %396 = vmatpush1.msra.mxu0 %v302
        %397 = vmatprep.subr.mxu0 0.0
        %398 = vmatpush1.msra.mxu0 %v303
        %399 = vmatprep.subr.mxu0 0.0
        %400 = vmatpush1.msra.mxu0 %v304
        %401 = vmatprep.subr.mxu0 0.0
        %402 = vmatpush1.msra.mxu0 %v305
        %403 = vmatprep.subr.mxu0 0.0
        %404 = vmatpush1.msra.mxu0 %v306
        %405 = vmatprep.subr.mxu0 0.0
        %406 = vmatpush1.msra.mxu0 %v307
        %407 = vmatprep.subr.mxu0 0.0
        %408 = vmatpush1.msra.mxu0 %v308
        %409 = vmatprep.subr.mxu0 0.0
        %410 = vmatpush1.msra.mxu0 %v309
        %411 = vmatprep.subr.mxu0 0.0
        %412 = vmatpush1.msra.mxu0 %v310
        %413 = vmatprep.subr.mxu0 0.0
        %414 = vmatpush1.msra.mxu0 %v311
        %415 = vmatprep.subr.mxu0 0.0
        %416 = vmatpush1.msra.mxu0 %v312
        %417 = vmatprep.subr.mxu0 0.0
        %418 = vmatpush1.msra.mxu0 0.0
        %419 = vmatprep.subr.mxu0 0.0
        %420 = vmatpush1.msra.mxu0 0.0
        %421 = vmatprep.subr.mxu0 0.0
        %422 = vmatpush1.msra.mxu0 0.0
        %423 = vmatprep.subr.mxu0 0.0
        %424 = vmatpush1.msra.mxu0 0.0
        %425 = vmatprep.subr.mxu0 0.0
        %426 = vmatpush1.msra.mxu0 0.0
        %427 = vmatprep.subr.mxu0 0.0
        %428 = vmatpush1.msra.mxu0 0.0
        %429 = vmatprep.subr.mxu0 0.0
        %430 = vmatpush1.msra.mxu0 0.0
        %431 = vmatprep.subr.mxu0 0.0
        %432 = vmatpush1.msra.mxu0 0.0
        %433 = vmatprep.subr.mxu0 0.0
        %434 = vmatpush1.msra.mxu0 0.0
        %435 = vmatprep.subr.mxu0 0.0
        %436 = vmatpush1.msra.mxu0 0.0
        %437 = vmatprep.subr.mxu0 0.0
        %438 = vmatpush1.msra.mxu0 0.0
        %439 = vmatprep.subr.mxu0 0.0
        %440 = vmatpush1.msra.mxu0 0.0
        %441 = vmatprep.subr.mxu0 0.0
        %442 = vmatpush1.msra.mxu0 0.0
        %443 = vmatprep.subr.mxu0 0.0
        %444 = vmatpush1.msra.mxu0 0.0
        %445 = vmatprep.subr.mxu0 0.0
        %446 = vmatpush1.msra.mxu0 0.0
        %447 = vmatprep.subr.mxu0 0.0
        %448 = vmatpush1.msra.mxu0 0.0
        %449 = vmatprep.mubr.f32.mxu0 0.0
        %450 = vmatmul.mubr.f32.gmra.mrb[0].mxu0 %v280
        %v451 = vpop.f32.mrb[0].mxu0
        %v452 = vadd.f32 0.0, %v451
        %v453 = vpop.f32.mrb[0].mxu0
        %454 = vdwg.mxu0
        %v455 = vrcp.pop %v384
        %v456 = vmul.f32 %v452, %v455
        %v457 = vmul.f32 %v456, %v279
        %s458 = scalar_lea.vmem [#allocation7], 128
        %v459 = vld [vmem:[%s458] sm:$0xff]
        %v460 = vld [vmem:[%s458 + $0x8] sm:$0xff]
        %v461 = vld [vmem:[%s458 + $0x10] sm:$0xff]
        %v462 = vld [vmem:[%s458 + $0x18] sm:$0xff]
        %v463 = vld [vmem:[%s458 + $0x20] sm:$0xff]
        %v464 = vld [vmem:[%s458 + $0x28] sm:$0xff]
        %v465 = vld [vmem:[%s458 + $0x30] sm:$0xff]
        %v466 = vld [vmem:[%s458 + $0x38] sm:$0xff]
        %v467 = vld [vmem:[%s458 + $0x40] sm:$0xff]
        %v468 = vld [vmem:[%s458 + $0x48] sm:$0xff]
        %v469 = vld [vmem:[%s458 + $0x50] sm:$0xff]
        %v470 = vld [vmem:[%s458 + $0x58] sm:$0xff]
        %v471 = vld [vmem:[%s458 + $0x60] sm:$0xff]
        %v472 = vld [vmem:[%s458 + $0x68] sm:$0xff]
        %v473 = vld [vmem:[%s458 + $0x70] sm:$0xff]
        %v474 = vld [vmem:[%s458 + $0x78] sm:$0xff]
        %s475 = scalar_lea.vmem [#allocation8], 128
        %v476 = vld [vmem:[%s475] sm:$0xff]
        %v477 = vld [vmem:[%s475 + $0x8] sm:$0xff]
        %v478 = vld [vmem:[%s475 + $0x10] sm:$0xff]
        %v479 = vld [vmem:[%s475 + $0x18] sm:$0xff]
        %v480 = vld [vmem:[%s475 + $0x20] sm:$0xff]
        %v481 = vld [vmem:[%s475 + $0x28] sm:$0xff]
        %v482 = vld [vmem:[%s475 + $0x30] sm:$0xff]
        %v483 = vld [vmem:[%s475 + $0x38] sm:$0xff]
        %v484 = vld [vmem:[%s475 + $0x40] sm:$0xff]
        %v485 = vld [vmem:[%s475 + $0x48] sm:$0xff]
        %v486 = vld [vmem:[%s475 + $0x50] sm:$0xff]
        %v487 = vld [vmem:[%s475 + $0x58] sm:$0xff]
        %v488 = vld [vmem:[%s475 + $0x60] sm:$0xff]
        %v489 = vld [vmem:[%s475 + $0x68] sm:$0xff]
        %v490 = vld [vmem:[%s475 + $0x70] sm:$0xff]
        %v491 = vld [vmem:[%s475 + $0x78] sm:$0xff]
        %v492 = vmul.f32 %v457, 0.05
        %493 = vmatprep.subr.mxu0 0.0
        %494 = vmatpush1.msra.mxu0 %v459
        %495 = vmatprep.subr.mxu0 0.0
        %496 = vmatpush1.msra.mxu0 %v460
        %497 = vmatprep.subr.mxu0 0.0
        %498 = vmatpush1.msra.mxu0 %v461
        %499 = vmatprep.subr.mxu0 0.0
        %500 = vmatpush1.msra.mxu0 %v462
        %501 = vmatprep.subr.mxu0 0.0
        %502 = vmatpush1.msra.mxu0 %v463
        %503 = vmatprep.subr.mxu0 0.0
        %504 = vmatpush1.msra.mxu0 %v464
        %505 = vmatprep.subr.mxu0 0.0
        %506 = vmatpush1.msra.mxu0 %v465
        %507 = vmatprep.subr.mxu0 0.0
        %508 = vmatpush1.msra.mxu0 %v466
        %509 = vmatprep.subr.mxu0 0.0
        %510 = vmatpush1.msra.mxu0 %v467
        %511 = vmatprep.subr.mxu0 0.0
        %512 = vmatpush1.msra.mxu0 %v468
        %513 = vmatprep.subr.mxu0 0.0
        %514 = vmatpush1.msra.mxu0 %v469
        %515 = vmatprep.subr.mxu0 0.0
        %516 = vmatpush1.msra.mxu0 %v470
        %517 = vmatprep.subr.mxu0 0.0
        %518 = vmatpush1.msra.mxu0 %v471
        %519 = vmatprep.subr.mxu0 0.0
        %520 = vmatpush1.msra.mxu0 %v472
        %521 = vmatprep.subr.mxu0 0.0
        %522 = vmatpush1.msra.mxu0 %v473
        %523 = vmatprep.subr.mxu0 0.0
        %524 = vmatpush1.msra.mxu0 %v474
        %525 = vmatprep.subr.mxu0 0.0
        %526 = vmatpush1.msra.mxu0 0.0
        %527 = vmatprep.subr.mxu0 0.0
        %528 = vmatpush1.msra.mxu0 0.0
        %529 = vmatprep.subr.mxu0 0.0
        %530 = vmatpush1.msra.mxu0 0.0
        %531 = vmatprep.subr.mxu0 0.0
        %532 = vmatpush1.msra.mxu0 0.0
        %533 = vmatprep.subr.mxu0 0.0
        %534 = vmatpush1.msra.mxu0 0.0
        %535 = vmatprep.subr.mxu0 0.0
        %536 = vmatpush1.msra.mxu0 0.0
        %537 = vmatprep.subr.mxu0 0.0
        %538 = vmatpush1.msra.mxu0 0.0
        %539 = vmatprep.subr.mxu0 0.0
        %540 = vmatpush1.msra.mxu0 0.0
        %541 = vmatprep.subr.mxu0 0.0
        %542 = vmatpush1.msra.mxu0 0.0
        %543 = vmatprep.subr.mxu0 0.0
        %544 = vmatpush1.msra.mxu0 0.0
        %545 = vmatprep.subr.mxu0 0.0
        %546 = vmatpush1.msra.mxu0 0.0
        %547 = vmatprep.subr.mxu0 0.0
        %548 = vmatpush1.msra.mxu0 0.0
        %549 = vmatprep.subr.mxu0 0.0
        %550 = vmatpush1.msra.mxu0 0.0
        %551 = vmatprep.subr.mxu0 0.0
        %552 = vmatpush1.msra.mxu0 0.0
        %553 = vmatprep.subr.mxu0 0.0
        %554 = vmatpush1.msra.mxu0 0.0
        %555 = vmatprep.subr.mxu0 0.0
        %556 = vmatpush1.msra.mxu0 0.0
        %557 = vmatprep.mubr.f32.mxu0 0.0
        %558 = vmatmul.mubr.f32.gmra.mrb[0].mxu0 %v457
        %v559 = vpop.f32.mrb[0].mxu0
        %v560 = vadd.f32 %v492, %v559
        %v561 = vpop.f32.mrb[0].mxu0
        %562 = vdwg.mxu0
        %v563 = vadd.f32 %v560, 0.10000012
        %564 = vmatprep.subr.mxu0 0.0
        %565 = vmatpush1.msra.mxu0 %v476
        %566 = vmatprep.subr.mxu0 0.0
        %567 = vmatpush1.msra.mxu0 %v477
        %568 = vmatprep.subr.mxu0 0.0
        %569 = vmatpush1.msra.mxu0 %v478
        %570 = vmatprep.subr.mxu0 0.0
        %571 = vmatpush1.msra.mxu0 %v479
        %572 = vmatprep.subr.mxu0 0.0
        %573 = vmatpush1.msra.mxu0 %v480
        %574 = vmatprep.subr.mxu0 0.0
        %575 = vmatpush1.msra.mxu0 %v481
        %576 = vmatprep.subr.mxu0 0.0
        %577 = vmatpush1.msra.mxu0 %v482
        %578 = vmatprep.subr.mxu0 0.0
        %579 = vmatpush1.msra.mxu0 %v483
        %580 = vmatprep.subr.mxu0 0.0
        %581 = vmatpush1.msra.mxu0 %v484
        %582 = vmatprep.subr.mxu0 0.0
        %583 = vmatpush1.msra.mxu0 %v485
        %584 = vmatprep.subr.mxu0 0.0
        %585 = vmatpush1.msra.mxu0 %v486
        %586 = vmatprep.subr.mxu0 0.0
        %587 = vmatpush1.msra.mxu0 %v487
        %588 = vmatprep.subr.mxu0 0.0
        %589 = vmatpush1.msra.mxu0 %v488
        %590 = vmatprep.subr.mxu0 0.0
        %591 = vmatpush1.msra.mxu0 %v489
        %592 = vmatprep.subr.mxu0 0.0
        %593 = vmatpush1.msra.mxu0 %v490
        %594 = vmatprep.subr.mxu0 0.0
        %595 = vmatpush1.msra.mxu0 %v491
        %596 = vmatprep.subr.mxu0 0.0
        %597 = vmatpush1.msra.mxu0 0.0
        %598 = vmatprep.subr.mxu0 0.0
        %599 = vmatpush1.msra.mxu0 0.0
        %600 = vmatprep.subr.mxu0 0.0
        %601 = vmatpush1.msra.mxu0 0.0
        %602 = vmatprep.subr.mxu0 0.0
        %603 = vmatpush1.msra.mxu0 0.0
        %604 = vmatprep.subr.mxu0 0.0
        %605 = vmatpush1.msra.mxu0 0.0
        %606 = vmatprep.subr.mxu0 0.0
        %607 = vmatpush1.msra.mxu0 0.0
        %608 = vmatprep.subr.mxu0 0.0
        %609 = vmatpush1.msra.mxu0 0.0
        %610 = vmatprep.subr.mxu0 0.0
        %611 = vmatpush1.msra.mxu0 0.0
        %612 = vmatprep.subr.mxu0 0.0
        %613 = vmatpush1.msra.mxu0 0.0
        %614 = vmatprep.subr.mxu0 0.0
        %615 = vmatpush1.msra.mxu0 0.0
        %616 = vmatprep.subr.mxu0 0.0
        %617 = vmatpush1.msra.mxu0 0.0
        %618 = vmatprep.subr.mxu0 0.0
        %619 = vmatpush1.msra.mxu0 0.0
        %620 = vmatprep.subr.mxu0 0.0
        %621 = vmatpush1.msra.mxu0 0.0
        %622 = vmatprep.subr.mxu0 0.0
        %623 = vmatpush1.msra.mxu0 0.0
        %624 = vmatprep.subr.mxu0 0.0
        %625 = vmatpush1.msra.mxu0 0.0
        %626 = vmatprep.subr.mxu0 0.0
        %627 = vmatpush1.msra.mxu0 0.0
        %628 = vmatprep.mubr.f32.mxu0 0.0
        %629 = vmatmul.mubr.f32.gmra.mrb[0].mxu0 %v280
        %v630 = vpop.f32.mrb[0].mxu0
        %v631 = vadd.f32 0.0, %v630
        %v632 = vpop.f32.mrb[0].mxu0
        %633 = vdwg.mxu0
        %v634 = vrcp.pop %v563
        %v635 = vmul.f32 %v631, %v634
        %v636 = vmul.f32 %v635, %v457
        %s637 = scalar_lea.vmem [#allocation7], 256
        %v638 = vld [vmem:[%s637] sm:$0xff]
        %v639 = vld [vmem:[%s637 + $0x8] sm:$0xff]
        %v640 = vld [vmem:[%s637 + $0x10] sm:$0xff]
        %v641 = vld [vmem:[%s637 + $0x18] sm:$0xff]
        %v642 = vld [vmem:[%s637 + $0x20] sm:$0xff]
        %v643 = vld [vmem:[%s637 + $0x28] sm:$0xff]
        %v644 = vld [vmem:[%s637 + $0x30] sm:$0xff]
        %v645 = vld [vmem:[%s637 + $0x38] sm:$0xff]
        %v646 = vld [vmem:[%s637 + $0x40] sm:$0xff]
        %v647 = vld [vmem:[%s637 + $0x48] sm:$0xff]
        %v648 = vld [vmem:[%s637 + $0x50] sm:$0xff]
        %v649 = vld [vmem:[%s637 + $0x58] sm:$0xff]
        %v650 = vld [vmem:[%s637 + $0x60] sm:$0xff]
        %v651 = vld [vmem:[%s637 + $0x68] sm:$0xff]
        %v652 = vld [vmem:[%s637 + $0x70] sm:$0xff]
        %v653 = vld [vmem:[%s637 + $0x78] sm:$0xff]
        %s654 = scalar_lea.vmem [#allocation8], 256
        %v655 = vld [vmem:[%s654] sm:$0xff]
        %v656 = vld [vmem:[%s654 + $0x8] sm:$0xff]
        %v657 = vld [vmem:[%s654 + $0x10] sm:$0xff]
        %v658 = vld [vmem:[%s654 + $0x18] sm:$0xff]
        %v659 = vld [vmem:[%s654 + $0x20] sm:$0xff]
        %v660 = vld [vmem:[%s654 + $0x28] sm:$0xff]
        %v661 = vld [vmem:[%s654 + $0x30] sm:$0xff]
        %v662 = vld [vmem:[%s654 + $0x38] sm:$0xff]
        %v663 = vld [vmem:[%s654 + $0x40] sm:$0xff]
        %v664 = vld [vmem:[%s654 + $0x48] sm:$0xff]
        %v665 = vld [vmem:[%s654 + $0x50] sm:$0xff]
        %v666 = vld [vmem:[%s654 + $0x58] sm:$0xff]
        %v667 = vld [vmem:[%s654 + $0x60] sm:$0xff]
        %v668 = vld [vmem:[%s654 + $0x68] sm:$0xff]
        %v669 = vld [vmem:[%s654 + $0x70] sm:$0xff]
        %v670 = vld [vmem:[%s654 + $0x78] sm:$0xff]
        %v671 = vmul.f32 %v636, 0.05
        %672 = vmatprep.subr.mxu0 0.0
        %673 = vmatpush1.msra.mxu0 %v638
        %674 = vmatprep.subr.mxu0 0.0
        %675 = vmatpush1.msra.mxu0 %v639
        %676 = vmatprep.subr.mxu0 0.0
        %677 = vmatpush1.msra.mxu0 %v640
        %678 = vmatprep.subr.mxu0 0.0
        %679 = vmatpush1.msra.mxu0 %v641
        %680 = vmatprep.subr.mxu0 0.0
        %681 = vmatpush1.msra.mxu0 %v642
        %682 = vmatprep.subr.mxu0 0.0
        %683 = vmatpush1.msra.mxu0 %v643
        %684 = vmatprep.subr.mxu0 0.0
        %685 = vmatpush1.msra.mxu0 %v644
        %686 = vmatprep.subr.mxu0 0.0
        %687 = vmatpush1.msra.mxu0 %v645
        %688 = vmatprep.subr.mxu0 0.0
        %689 = vmatpush1.msra.mxu0 %v646
        %690 = vmatprep.subr.mxu0 0.0
        %691 = vmatpush1.msra.mxu0 %v647
        %692 = vmatprep.subr.mxu0 0.0
        %693 = vmatpush1.msra.mxu0 %v648
        %694 = vmatprep.subr.mxu0 0.0
        %695 = vmatpush1.msra.mxu0 %v649
        %696 = vmatprep.subr.mxu0 0.0
        %697 = vmatpush1.msra.mxu0 %v650
        %698 = vmatprep.subr.mxu0 0.0
        %699 = vmatpush1.msra.mxu0 %v651
        %700 = vmatprep.subr.mxu0 0.0
        %701 = vmatpush1.msra.mxu0 %v652
        %702 = vmatprep.subr.mxu0 0.0
        %703 = vmatpush1.msra.mxu0 %v653
        %704 = vmatprep.subr.mxu0 0.0
        %705 = vmatpush1.msra.mxu0 0.0
        %706 = vmatprep.subr.mxu0 0.0
        %707 = vmatpush1.msra.mxu0 0.0
        %708 = vmatprep.subr.mxu0 0.0
        %709 = vmatpush1.msra.mxu0 0.0
        %710 = vmatprep.subr.mxu0 0.0
        %711 = vmatpush1.msra.mxu0 0.0
        %712 = vmatprep.subr.mxu0 0.0
        %713 = vmatpush1.msra.mxu0 0.0
        %714 = vmatprep.subr.mxu0 0.0
        %715 = vmatpush1.msra.mxu0 0.0
        %716 = vmatprep.subr.mxu0 0.0
        %717 = vmatpush1.msra.mxu0 0.0
        %718 = vmatprep.subr.mxu0 0.0
        %719 = vmatpush1.msra.mxu0 0.0
        %720 = vmatprep.subr.mxu0 0.0
        %721 = vmatpush1.msra.mxu0 0.0
        %722 = vmatprep.subr.mxu0 0.0
        %723 = vmatpush1.msra.mxu0 0.0
        %724 = vmatprep.subr.mxu0 0.0
        %725 = vmatpush1.msra.mxu0 0.0
        %726 = vmatprep.subr.mxu0 0.0
        %727 = vmatpush1.msra.mxu0 0.0
        %728 = vmatprep.subr.mxu0 0.0
        %729 = vmatpush1.msra.mxu0 0.0
        %730 = vmatprep.subr.mxu0 0.0
        %731 = vmatpush1.msra.mxu0 0.0
        %732 = vmatprep.subr.mxu0 0.0
        %733 = vmatpush1.msra.mxu0 0.0
        %734 = vmatprep.subr.mxu0 0.0
        %735 = vmatpush1.msra.mxu0 0.0
        %736 = vmatprep.mubr.f32.mxu0 0.0
        %737 = vmatmul.mubr.f32.gmra.mrb[0].mxu0 %v636
        %v738 = vpop.f32.mrb[0].mxu0
        %v739 = vadd.f32 %v671, %v738
        %v740 = vpop.f32.mrb[0].mxu0
        %741 = vdwg.mxu0
        %v742 = vadd.f32 %v739, 0.10000012
        %743 = vmatprep.subr.mxu0 0.0
        %744 = vmatpush1.msra.mxu0 %v655
        %745 = vmatprep.subr.mxu0 0.0
        %746 = vmatpush1.msra.mxu0 %v656
        %747 = vmatprep.subr.mxu0 0.0
        %748 = vmatpush1.msra.mxu0 %v657
        %749 = vmatprep.subr.mxu0 0.0
        %750 = vmatpush1.msra.mxu0 %v658
        %751 = vmatprep.subr.mxu0 0.0
        %752 = vmatpush1.msra.mxu0 %v659
        %753 = vmatprep.subr.mxu0 0.0
        %754 = vmatpush1.msra.mxu0 %v660
        %755 = vmatprep.subr.mxu0 0.0
        %756 = vmatpush1.msra.mxu0 %v661
        %757 = vmatprep.subr.mxu0 0.0
        %758 = vmatpush1.msra.mxu0 %v662
        %759 = vmatprep.subr.mxu0 0.0
        %760 = vmatpush1.msra.mxu0 %v663
        %761 = vmatprep.subr.mxu0 0.0
        %762 = vmatpush1.msra.mxu0 %v664
        %763 = vmatprep.subr.mxu0 0.0
        %764 = vmatpush1.msra.mxu0 %v665
        %765 = vmatprep.subr.mxu0 0.0
        %766 = vmatpush1.msra.mxu0 %v666
        %767 = vmatprep.subr.mxu0 0.0
        %768 = vmatpush1.msra.mxu0 %v667
        %769 = vmatprep.subr.mxu0 0.0
        %770 = vmatpush1.msra.mxu0 %v668
        %771 = vmatprep.subr.mxu0 0.0
        %772 = vmatpush1.msra.mxu0 %v669
        %773 = vmatprep.subr.mxu0 0.0
        %774 = vmatpush1.msra.mxu0 %v670
        %775 = vmatprep.subr.mxu0 0.0
        %776 = vmatpush1.msra.mxu0 0.0
        %777 = vmatprep.subr.mxu0 0.0
        %778 = vmatpush1.msra.mxu0 0.0
        %779 = vmatprep.subr.mxu0 0.0
        %780 = vmatpush1.msra.mxu0 0.0
        %781 = vmatprep.subr.mxu0 0.0
        %782 = vmatpush1.msra.mxu0 0.0
        %783 = vmatprep.subr.mxu0 0.0
        %784 = vmatpush1.msra.mxu0 0.0
        %785 = vmatprep.subr.mxu0 0.0
        %786 = vmatpush1.msra.mxu0 0.0
        %787 = vmatprep.subr.mxu0 0.0
        %788 = vmatpush1.msra.mxu0 0.0
        %789 = vmatprep.subr.mxu0 0.0
        %790 = vmatpush1.msra.mxu0 0.0
        %791 = vmatprep.subr.mxu0 0.0
        %792 = vmatpush1.msra.mxu0 0.0
        %793 = vmatprep.subr.mxu0 0.0
        %794 = vmatpush1.msra.mxu0 0.0
        %795 = vmatprep.subr.mxu0 0.0
        %796 = vmatpush1.msra.mxu0 0.0
        %797 = vmatprep.subr.mxu0 0.0
        %798 = vmatpush1.msra.mxu0 0.0
        %799 = vmatprep.subr.mxu0 0.0
        %800 = vmatpush1.msra.mxu0 0.0
        %801 = vmatprep.subr.mxu0 0.0
        %802 = vmatpush1.msra.mxu0 0.0
        %803 = vmatprep.subr.mxu0 0.0
        %804 = vmatpush1.msra.mxu0 0.0
        %805 = vmatprep.subr.mxu0 0.0
        %806 = vmatpush1.msra.mxu0 0.0
        %807 = vmatprep.mubr.f32.mxu0 0.0
        %808 = vmatmul.mubr.f32.gmra.mrb[0].mxu0 %v280
        %v809 = vpop.f32.mrb[0].mxu0
        %v810 = vadd.f32 0.0, %v809
        %v811 = vpop.f32.mrb[0].mxu0
        %812 = vdwg.mxu0
        %v813 = vrcp.pop %v742
        %v814 = vmul.f32 %v810, %v813
        %v815 = vmul.f32 %v814, %v636
        %s816 = scalar_lea.vmem [#allocation7], 384
        %v817 = vld [vmem:[%s816] sm:$0xff]
        %v818 = vld [vmem:[%s816 + $0x8] sm:$0xff]
        %v819 = vld [vmem:[%s816 + $0x10] sm:$0xff]
        %v820 = vld [vmem:[%s816 + $0x18] sm:$0xff]
        %v821 = vld [vmem:[%s816 + $0x20] sm:$0xff]
        %v822 = vld [vmem:[%s816 + $0x28] sm:$0xff]
        %v823 = vld [vmem:[%s816 + $0x30] sm:$0xff]
        %v824 = vld [vmem:[%s816 + $0x38] sm:$0xff]
        %v825 = vld [vmem:[%s816 + $0x40] sm:$0xff]
        %v826 = vld [vmem:[%s816 + $0x48] sm:$0xff]
        %v827 = vld [vmem:[%s816 + $0x50] sm:$0xff]
        %v828 = vld [vmem:[%s816 + $0x58] sm:$0xff]
        %v829 = vld [vmem:[%s816 + $0x60] sm:$0xff]
        %v830 = vld [vmem:[%s816 + $0x68] sm:$0xff]
        %v831 = vld [vmem:[%s816 + $0x70] sm:$0xff]
        %v832 = vld [vmem:[%s816 + $0x78] sm:$0xff]
        %s833 = scalar_lea.vmem [#allocation8], 384
        %v834 = vld [vmem:[%s833] sm:$0xff]
        %v835 = vld [vmem:[%s833 + $0x8] sm:$0xff]
        %v836 = vld [vmem:[%s833 + $0x10] sm:$0xff]
        %v837 = vld [vmem:[%s833 + $0x18] sm:$0xff]
        %v838 = vld [vmem:[%s833 + $0x20] sm:$0xff]
        %v839 = vld [vmem:[%s833 + $0x28] sm:$0xff]
        %v840 = vld [vmem:[%s833 + $0x30] sm:$0xff]
        %v841 = vld [vmem:[%s833 + $0x38] sm:$0xff]
        %v842 = vld [vmem:[%s833 + $0x40] sm:$0xff]
        %v843 = vld [vmem:[%s833 + $0x48] sm:$0xff]
        %v844 = vld [vmem:[%s833 + $0x50] sm:$0xff]
        %v845 = vld [vmem:[%s833 + $0x58] sm:$0xff]
        %v846 = vld [vmem:[%s833 + $0x60] sm:$0xff]
        %v847 = vld [vmem:[%s833 + $0x68] sm:$0xff]
        %v848 = vld [vmem:[%s833 + $0x70] sm:$0xff]
        %v849 = vld [vmem:[%s833 + $0x78] sm:$0xff]
        %v850 = vmul.f32 %v815, 0.05
        %851 = vmatprep.subr.mxu0 0.0
        %852 = vmatpush1.msra.mxu0 %v817
        %853 = vmatprep.subr.mxu0 0.0
        %854 = vmatpush1.msra.mxu0 %v818
        %855 = vmatprep.subr.mxu0 0.0
        %856 = vmatpush1.msra.mxu0 %v819
        %857 = vmatprep.subr.mxu0 0.0
        %858 = vmatpush1.msra.mxu0 %v820
        %859 = vmatprep.subr.mxu0 0.0
        %860 = vmatpush1.msra.mxu0 %v821
        %861 = vmatprep.subr.mxu0 0.0
        %862 = vmatpush1.msra.mxu0 %v822
        %863 = vmatprep.subr.mxu0 0.0
        %864 = vmatpush1.msra.mxu0 %v823
        %865 = vmatprep.subr.mxu0 0.0
        %866 = vmatpush1.msra.mxu0 %v824
        %867 = vmatprep.subr.mxu0 0.0
        %868 = vmatpush1.msra.mxu0 %v825
        %869 = vmatprep.subr.mxu0 0.0
        %870 = vmatpush1.msra.mxu0 %v826
        %871 = vmatprep.subr.mxu0 0.0
        %872 = vmatpush1.msra.mxu0 %v827
        %873 = vmatprep.subr.mxu0 0.0
        %874 = vmatpush1.msra.mxu0 %v828
        %875 = vmatprep.subr.mxu0 0.0
        %876 = vmatpush1.msra.mxu0 %v829
        %877 = vmatprep.subr.mxu0 0.0
        %878 = vmatpush1.msra.mxu0 %v830
        %879 = vmatprep.subr.mxu0 0.0
        %880 = vmatpush1.msra.mxu0 %v831
        %881 = vmatprep.subr.mxu0 0.0
        %882 = vmatpush1.msra.mxu0 %v832
        %883 = vmatprep.subr.mxu0 0.0
        %884 = vmatpush1.msra.mxu0 0.0
        %885 = vmatprep.subr.mxu0 0.0
        %886 = vmatpush1.msra.mxu0 0.0
        %887 = vmatprep.subr.mxu0 0.0
        %888 = vmatpush1.msra.mxu0 0.0
        %889 = vmatprep.subr.mxu0 0.0
        %890 = vmatpush1.msra.mxu0 0.0
        %891 = vmatprep.subr.mxu0 0.0
        %892 = vmatpush1.msra.mxu0 0.0
        %893 = vmatprep.subr.mxu0 0.0
        %894 = vmatpush1.msra.mxu0 0.0
        %895 = vmatprep.subr.mxu0 0.0
        %896 = vmatpush1.msra.mxu0 0.0
        %897 = vmatprep.subr.mxu0 0.0
        %898 = vmatpush1.msra.mxu0 0.0
        %899 = vmatprep.subr.mxu0 0.0
        %900 = vmatpush1.msra.mxu0 0.0
        %901 = vmatprep.subr.mxu0 0.0
        %902 = vmatpush1.msra.mxu0 0.0
        %903 = vmatprep.subr.mxu0 0.0
        %904 = vmatpush1.msra.mxu0 0.0
        %905 = vmatprep.subr.mxu0 0.0
        %906 = vmatpush1.msra.mxu0 0.0
        %907 = vmatprep.subr.mxu0 0.0
        %908 = vmatpush1.msra.mxu0 0.0
        %909 = vmatprep.subr.mxu0 0.0
        %910 = vmatpush1.msra.mxu0 0.0
        %911 = vmatprep.subr.mxu0 0.0
        %912 = vmatpush1.msra.mxu0 0.0
        %913 = vmatprep.subr.mxu0 0.0
        %914 = vmatpush1.msra.mxu0 0.0
        %915 = vmatprep.mubr.f32.mxu0 0.0
        %916 = vmatmul.mubr.f32.gmra.mrb[0].mxu0 %v815
        %v917 = vpop.f32.mrb[0].mxu0
        %v918 = vadd.f32 %v850, %v917
        %v919 = vpop.f32.mrb[0].mxu0
        %920 = vdwg.mxu0
        %v921 = vadd.f32 %v918, 0.10000012
        %922 = vmatprep.subr.mxu0 0.0
        %923 = vmatpush1.msra.mxu0 %v834
        %924 = vmatprep.subr.mxu0 0.0
        %925 = vmatpush1.msra.mxu0 %v835
        %926 = vmatprep.subr.mxu0 0.0
        %927 = vmatpush1.msra.mxu0 %v836
        %928 = vmatprep.subr.mxu0 0.0
        %929 = vmatpush1.msra.mxu0 %v837
        %930 = vmatprep.subr.mxu0 0.0
        %931 = vmatpush1.msra.mxu0 %v838
        %932 = vmatprep.subr.mxu0 0.0
        %933 = vmatpush1.msra.mxu0 %v839
        %934 = vmatprep.subr.mxu0 0.0
        %935 = vmatpush1.msra.mxu0 %v840
        %936 = vmatprep.subr.mxu0 0.0
        %937 = vmatpush1.msra.mxu0 %v841
        %938 = vmatprep.subr.mxu0 0.0
        %939 = vmatpush1.msra.mxu0 %v842
        %940 = vmatprep.subr.mxu0 0.0
        %941 = vmatpush1.msra.mxu0 %v843
        %942 = vmatprep.subr.mxu0 0.0
        %943 = vmatpush1.msra.mxu0 %v844
        %944 = vmatprep.subr.mxu0 0.0
        %945 = vmatpush1.msra.mxu0 %v845
        %946 = vmatprep.subr.mxu0 0.0
        %947 = vmatpush1.msra.mxu0 %v846
        %948 = vmatprep.subr.mxu0 0.0
        %949 = vmatpush1.msra.mxu0 %v847
        %950 = vmatprep.subr.mxu0 0.0
        %951 = vmatpush1.msra.mxu0 %v848
        %952 = vmatprep.subr.mxu0 0.0
        %953 = vmatpush1.msra.mxu0 %v849
        %954 = vmatprep.subr.mxu0 0.0
        %955 = vmatpush1.msra.mxu0 0.0
        %956 = vmatprep.subr.mxu0 0.0
        %957 = vmatpush1.msra.mxu0 0.0
        %958 = vmatprep.subr.mxu0 0.0
        %959 = vmatpush1.msra.mxu0 0.0
        %960 = vmatprep.subr.mxu0 0.0
        %961 = vmatpush1.msra.mxu0 0.0
        %962 = vmatprep.subr.mxu0 0.0
        %963 = vmatpush1.msra.mxu0 0.0
        %964 = vmatprep.subr.mxu0 0.0
        %965 = vmatpush1.msra.mxu0 0.0
        %966 = vmatprep.subr.mxu0 0.0
        %967 = vmatpush1.msra.mxu0 0.0
        %968 = vmatprep.subr.mxu0 0.0
        %969 = vmatpush1.msra.mxu0 0.0
        %970 = vmatprep.subr.mxu0 0.0
        %971 = vmatpush1.msra.mxu0 0.0
        %972 = vmatprep.subr.mxu0 0.0
        %973 = vmatpush1.msra.mxu0 0.0
        %974 = vmatprep.subr.mxu0 0.0
        %975 = vmatpush1.msra.mxu0 0.0
        %976 = vmatprep.subr.mxu0 0.0
        %977 = vmatpush1.msra.mxu0 0.0
        %978 = vmatprep.subr.mxu0 0.0
        %979 = vmatpush1.msra.mxu0 0.0
        %980 = vmatprep.subr.mxu0 0.0
        %981 = vmatpush1.msra.mxu0 0.0
        %982 = vmatprep.subr.mxu0 0.0
        %983 = vmatpush1.msra.mxu0 0.0
        %984 = vmatprep.subr.mxu0 0.0
        %985 = vmatpush1.msra.mxu0 0.0
        %986 = vmatprep.mubr.f32.mxu0 0.0
        %987 = vmatmul.mubr.f32.gmra.mrb[0].mxu0 %v280
        %v988 = vpop.f32.mrb[0].mxu0
        %v989 = vadd.f32 0.0, %v988
        %v990 = vpop.f32.mrb[0].mxu0
        %991 = vdwg.mxu0
        %v992 = vrcp.pop %v921
        %v993 = vmul.f32 %v989, %v992
        %v994 = vmul.f32 %v993, %v815
        %995 = vst [vmem:[%s278] sm:$0xff] %v994
        %s996 = sand.u32 %s127, 1
        %s997 = scalar_lea.sflag [#allocation4], %s996
        %s998 = sand.u32 %s127, 1
        %s999 = smul.addr %s998, 8
        %s1000 = scalar_lea.vmem [#allocation10], %s999
        // Predicated region
        $region53: #{tpu_custom_call.1} parent=35 // pred_check
          %p1001 = pneg %p137
        $region54: #{tpu_custom_call.1} parent=35 // pred_check_branch
          %1003 = sbr.rel (%p1001) target = $region56
        $region55: #{tpu_custom_call.1} parent=35 // pred_region
          %s1005 = ssub.s32 128, 128
          %1006 = vsyncadd %s997, %s1005
          %s1007 = smul.addr %s25, 128
          %s1008 = scalar_lea.hbm %s4, %s1007
          %s1010 = sshll.u32 %s1000, 4
          %s1011 = int_to_ptr.vmem [resolvable:$true] %s1010
          %1013 = dma.vmem_to_hbm [thread:$0]  %s1011, 128, %s1008, %s997
        $region56: #{tpu_custom_call.1} parent=35 // pred_fallthru
          _
      $region36: #{tpu_custom_call.1} parent=5 // pred_fallthru
        _
      %p1014 = scmp.le.s32.totalorder 2, %s20
      // Predicated region
      $region57: #{tpu_custom_call.1} parent=5 // pred_check
        %p1015 = pneg %p1014
      $region58: #{tpu_custom_call.1} parent=5 // pred_check_branch
        %1017 = sbr.rel (%p1015) target = $region60
      $region59: #{tpu_custom_call.1} parent=5 // pred_region
        %s1018 = ssub.s32 %s20, 2
        // Predicated region
        $region61: #{tpu_custom_call.1} parent=59 // pred_check
          %p1019 = pneg %p143
        $region62: #{tpu_custom_call.1} parent=59 // pred_check_branch
          %1021 = sbr.rel (%p1019) target = $region64
        $region63: #{tpu_custom_call.1} parent=59 // pred_region
          %s1022 = sand.u32 %s128, 1
          %s1023 = scalar_lea.sflag [#allocation4], %s1022
          %s1024 = sand.u32 %s128, 1
          %s1025 = smul.addr %s1024, 8
          %s1026 = scalar_lea.vmem [#allocation10], %s1025
          %1027 = dma.done %s1023, 128
        $region64: #{tpu_custom_call.1} parent=59 // pred_fallthru
          _
      $region60: #{tpu_custom_call.1} parent=5 // pred_fallthru
        _
    $region6: #{tpu_custom_call.1} parent=1 // loop_footer
      %s24 = sadd.s32 1, %s20
    $region7: #{tpu_custom_call.1} parent=1 // loop_footer_branch
      %19 = sbr.rel target = $region3
    $region8: #{tpu_custom_call.1} parent=1 // loop_exit
      _
    %1028 = vsyncpa [#allocation3], 1
    %s1029 = scalar_lea.sflag [#allocation3], 1
    %1030 = vsyncpa %s1029, 1
    %1031 = vsyncpa [#allocation6], 1
    %s1032 = scalar_lea.sflag [#allocation6], 1
    %1033 = vsyncpa %s1032, 1
    %1034 = vsyncpa [#allocation9], 1
    %1035 = vsyncpa [#allocation4], 1
    %s1036 = scalar_lea.sflag [#allocation4], 1
    %1037 = vsyncpa %s1036, 1

</llo_original>
